<compile_context>
chip_gen: v6e
topology: v6e:2x2x1
jax: 0.10.0
libtpu: 0.0.40
codegen_flags: <defaults>
</compile_context>

<pallas_src>
import jax
import jax.numpy as jnp
from jax.experimental import pallas as pl
from jax.experimental.pallas import tpu as pltpu

# ---- problem config (small synthetic shapes; L chosen lane-dense) ------------
N, C, L = 2, 16, 128     # batch, channels (= in_layer = out_layer), length
K = 3                    # kernel_size
EPS = 1e-5               # BatchNorm1d eps
C8 = C // 8              # se_block bottleneck width
NL = N * L


# ---- Pallas kernel ------------------------------------------------------------
def re_block_kernel(x_ref, w1_ref, g1_ref, be1_ref,
                    w2_ref, g2_ref, be2_ref,
                    ws1_ref, bs1_ref, ws2_ref, bs2_ref,
                    out_ref,
                    xp_ref, taps_ref, stat_ref):
    # Per-lane position inside its own sample; the masks replicate Conv1d's
    # zero padding and stop cross-sample leakage through the packed lane axis.
    lpos = jax.lax.broadcasted_iota(jnp.int32, (1, NL), 1) % L
    first = lpos == 0            # l == 0     -> left zero-pad tap
    last = lpos == (L - 1)       # l == L - 1 -> right zero-pad tap
    inv_cnt = 1.0 / float(NL)

    # Pack the N samples along lanes into scratch (lane offsets are multiples
    # of 128 -> aligned, unmasked stores); replaces the old lane concatenate.
    for n in range(N):
        xp_ref[:, n * L:(n + 1) * L] = x_ref[n]
    xp = xp_ref[...]                                             # (C, N*L) f32

    def conv_bn_relu(h, w_ref, g_ref, be_ref):
        # --- Conv1d(k=3, pad=1) as ONE bf16 MXU dot over tap-stacked input ---
        # Shifted halo taps: jnp.roll (portable across Mosaic + interpret),
        # masked at sample boundaries, written as full-width sublane-aligned
        # row slices of the bf16 taps scratch (no axis-0 concatenate copy).
        h_m1 = jnp.where(first, 0.0, jnp.roll(h, 1, axis=1))     # h[l-1]
        h_p1 = jnp.where(last, 0.0, jnp.roll(h, -1, axis=1))     # h[l+1]
        taps_ref[0:C, :] = h_m1.astype(jnp.bfloat16)
        taps_ref[C:2 * C, :] = h.astype(jnp.bfloat16)
        taps_ref[2 * C:3 * C, :] = h_p1.astype(jnp.bfloat16)
        y = jnp.dot(w_ref[...], taps_ref[...],                   # bf16 x bf16
                    preferred_element_type=jnp.float32)          # f32 accumulate
        # --- Training-mode BN folded into one per-channel scale/shift. -------
        # Single cross-lane reduce over a sublane-stacked [y; y*y] block gives
        # both stats in one XLU pass (instead of two on the critical path).
        # Conv bias omitted: batch-mean subtraction cancels it exactly.
        stat_ref[0:C, :] = y
        stat_ref[C:2 * C, :] = y * y
        sums = jnp.sum(stat_ref[...], axis=1, keepdims=True) * inv_cnt  # (2C,1)
        mean = sums[0:C, :]
        var = sums[C:2 * C, :] - mean * mean                     # biased var
        scale = g_ref[...] * jax.lax.rsqrt(var + EPS)            # (C, 1) f32
        shift = be_ref[...] - mean * scale
        return jnp.maximum(y * scale + shift, 0.0)               # (C, N*L) f32

    h = conv_bn_relu(xp, w1_ref, g1_ref, be1_ref)                # cbr1
    h = conv_bn_relu(h, w2_ref, g2_ref, be2_ref)                 # cbr2

    # --- se_block batched over N: (C, N) squeeze + two tiny bf16 MXU dots. ---
    inv_l = 1.0 / float(L)
    s = jnp.concatenate(                                         # (C, N), tiny
        [jnp.sum(h[:, n * L:(n + 1) * L], axis=1, keepdims=True) * inv_l
         for n in range(N)], axis=1)
    z = jnp.maximum(
        jnp.dot(ws1_ref[...], s.astype(jnp.bfloat16),
                preferred_element_type=jnp.float32) + bs1_ref[...], 0.0)
    gate = jax.nn.sigmoid(
        jnp.dot(ws2_ref[...], z.astype(jnp.bfloat16),
                preferred_element_type=jnp.float32) + bs2_ref[...])  # (C, N) f32

    # --- Residuals: fused lane-dense slab add; gate broadcasts hoisted out of
    #     the store path so each store is a plain unmasked 128-wide add+vst. --
    gate_cols = [jnp.broadcast_to(gate[:, n:n + 1], (C, L)) for n in range(N)]
    res = xp + h                                                 # x + cbr2(cbr1(x))
    for n in range(N):
        out_ref[n] = res[:, n * L:(n + 1) * L] + gate_cols[n]

    # TODO(synk): scale-up plan for realistic UNET_1D sizes: tile over L with a
    # grid whose L axis is "parallel" (fills v7x's 2nd TensorCore) and make BN
    # two-pass (stats kernel + normalize kernel, or shifted/Welford cross-tile
    # reduction; single-pass E[y^2]-E[y]^2 is cancellation-prone at scale);
    # size tiles against v7x's 64 MiB VMEM including the 2x double-buffer
    # multiplier and set vmem_limit_bytes explicitly; pick channel tiles so the
    # conv dot's output rows and K*C contraction are >=128 (>=256 on v6e/v7x)
    # to fill the MXU; on v6e/v5e keep the whole lane-dense slab resident and
    # only grid when VMEM forces it; on v7x (3.2 TB/s HBM) the block is
    # memory-bound, so prefer bf16 activations / fewer HBM bytes per element
    # over matmul micro-optimization.


# ---- wrapper (NCL in / NCL out, no data transposes) ----------------------------
def re_block_pallas(x_ncl, p):
    x = x_ncl.astype(jnp.float32)

    def conv_w(w):
        # PyTorch (C_out, C_in, K) -> tap-stacked (C_out, K*C_in) in bf16,
        # row-block order matching taps = [x[l-1], x[l], x[l+1]].
        return jnp.transpose(w, (0, 2, 1)).reshape(w.shape[0], -1).astype(jnp.bfloat16)

    col = lambda v: v.reshape(-1, 1).astype(jnp.float32)

    args = (x,
            conv_w(p["w1"]), col(p["g1"]), col(p["be1"]),
            conv_w(p["w2"]), col(p["g2"]), col(p["be2"]),
            p["ws1"][:, :, 0].astype(jnp.bfloat16), col(p["bs1"]),
            p["ws2"][:, :, 0].astype(jnp.bfloat16), col(p["bs2"]))

    # Advisory cost hint for XLA scheduling around the custom call.
    flops = 2 * C * (3 * C) * NL * 2 + 2 * N * (C8 * C + C * C8) + 12 * C * NL
    bytes_accessed = (2 * N * C * L * 4            # x in + out (f32)
                      + 2 * (C * 3 * C) * 2        # conv weights (bf16)
                      + (2 * C8 * C) * 2           # SE weights (bf16)
                      + (4 * C + 2 * C8) * 4)      # BN/SE vectors (f32)
    vmem = pl.BlockSpec(memory_space=pltpu.MemorySpace.VMEM)
    return pl.pallas_call(
        re_block_kernel,
        out_shape=jax.ShapeDtypeStruct((N, C, L), jnp.float32),
        in_specs=[vmem] * len(args),
        out_specs=vmem,
        scratch_shapes=[
            pltpu.VMEM((C, NL), jnp.float32),        # packed (C, N*L) input slab
            pltpu.VMEM((3 * C, NL), jnp.bfloat16),   # tap-stacked conv input
            pltpu.VMEM((2 * C, NL), jnp.float32),    # [y; y*y] for fused BN stats
        ],
        cost_estimate=pl.CostEstimate(
            flops=flops, transcendentals=2 * C + N * C,
            bytes_accessed=bytes_accessed),
    )(*args)


# ---- pure-JAX reference (mirrors the PyTorch forward, bias included) -----------
def ref_forward(x, p, dot_dtype):
    """dot_dtype=f32 -> exact spec semantics; dot_dtype=bf16 -> the same
    operand rounding the kernel's MXU dots apply (f32 accumulation)."""
    d = dot_dtype

    def conv_bn_relu(h, w, b, g, beta):
        y = jax.lax.conv_general_dilated(
            h.astype(d), w.astype(d), window_strides=(1,), padding=[(1, 1)],
            rhs_dilation=(1,), dimension_numbers=("NCH", "OIH", "NCH"),
            preferred_element_type=jnp.float32) + b[None, :, None]
        mu = jnp.mean(y, axis=(0, 2), keepdims=True)
        var = jnp.mean((y - mu) ** 2, axis=(0, 2), keepdims=True)
        y = (y - mu) / jnp.sqrt(var + EPS)
        y = y * g[None, :, None] + beta[None, :, None]
        return jnp.maximum(y, 0.0)

    h = conv_bn_relu(x, p["w1"], p["b1"], p["g1"], p["be1"])
    h = conv_bn_relu(h, p["w2"], p["b2"], p["g2"], p["be2"])
    s = jnp.mean(h, axis=2, keepdims=True)                           # (N, C, 1)
    s1 = jnp.maximum(
        jnp.einsum("oc,ncl->nol", p["ws1"][:, :, 0].astype(d), s.astype(d),
                   preferred_element_type=jnp.float32)
        + p["bs1"][None, :, None], 0.0)
    s2 = jax.nn.sigmoid(
        jnp.einsum("oc,ncl->nol", p["ws2"][:, :, 0].astype(d), s1.astype(d),
                   preferred_element_type=jnp.float32)
        + p["bs2"][None, :, None])
    return x + (h + s2)


# ---- main -----------------------------------------------------------------------
if __name__ == "__main__":
    key = jax.random.PRNGKey(0)
    ks = jax.random.split(key, 13)
    p = {
        "w1":  0.2 * jax.random.normal(ks[0],  (C, C, K), jnp.float32),
        "b1":  0.1 * jax.random.normal(ks[1],  (C,),      jnp.float32),
        "g1":  1.0 + 0.1 * jax.random.normal(ks[2], (C,), jnp.float32),
        "be1": 0.1 * jax.random.normal(ks[3],  (C,),      jnp.float32),
        "w2":  0.2 * jax.random.normal(ks[4],  (C, C, K), jnp.float32),
        "b2":  0.1 * jax.random.normal(ks[5],  (C,),      jnp.float32),
        "g2":  1.0 + 0.1 * jax.random.normal(ks[6], (C,), jnp.float32),
        "be2": 0.1 * jax.random.normal(ks[7],  (C,),      jnp.float32),
        "ws1": 0.2 * jax.random.normal(ks[8],  (C8, C, 1), jnp.float32),
        "bs1": 0.1 * jax.random.normal(ks[9],  (C8,),      jnp.float32),
        "ws2": 0.2 * jax.random.normal(ks[10], (C, C8, 1), jnp.float32),
        "bs2": 0.1 * jax.random.normal(ks[11], (C,),       jnp.float32),
    }
    # TODO(synk): se_block.fc / fc2 are defined but unused in the PyTorch
    # forward, so they are intentionally not instantiated here.
    x = jax.random.normal(ks[12], (N, C, L), jnp.float32)

    out = jax.block_until_ready(re_block_pallas(x, p))
    assert out.shape == (N, C, L)

    # Tight check: same math as the kernel (bf16 dot operands, f32 everything
    # else) -> should agree to accumulation-order / rounding-boundary noise.
    ref_mxu = jax.block_until_ready(ref_forward(x, p, jnp.bfloat16))
    err_tight = float(jnp.max(jnp.abs(out - ref_mxu)))
    assert err_tight < 1e-2, f"kernel vs bf16-operand reference: {err_tight}"

    # Sanity check against the exact f32 PyTorch-spec forward; tolerance is the
    # expected drift budget from bf16 MXU operands through two convs.
    ref_f32 = jax.block_until_ready(ref_forward(x, p, jnp.float32))
    err_spec = float(jnp.max(jnp.abs(out - ref_f32)))
    assert err_spec < 1e-1, f"kernel vs f32 spec reference: {err_spec}"

    print("KERNEL_OK")
</pallas_src>

<mosaic_0001>
module attributes {stable_mosaic.version = 11 : i64} {
  func.func @re_block_kernel(%arg0: memref<2x16x128xf32, #tpu.memory_space<vmem>>, %arg1: memref<16x48xbf16, #tpu.memory_space<vmem>>, %arg2: memref<16x1xf32, #tpu.memory_space<vmem>>, %arg3: memref<16x1xf32, #tpu.memory_space<vmem>>, %arg4: memref<16x48xbf16, #tpu.memory_space<vmem>>, %arg5: memref<16x1xf32, #tpu.memory_space<vmem>>, %arg6: memref<16x1xf32, #tpu.memory_space<vmem>>, %arg7: memref<2x16xbf16, #tpu.memory_space<vmem>>, %arg8: memref<2x1xf32, #tpu.memory_space<vmem>>, %arg9: memref<16x2xbf16, #tpu.memory_space<vmem>>, %arg10: memref<16x1xf32, #tpu.memory_space<vmem>>, %arg11: memref<2x16x128xf32, #tpu.memory_space<vmem>>, %arg12: memref<16x256xf32, #tpu.memory_space<vmem>>, %arg13: memref<48x256xbf16, #tpu.memory_space<vmem>>, %arg14: memref<32x256xf32, #tpu.memory_space<vmem>>) attributes {dimension_semantics = [], scalar_prefetch = 0 : i64, scratch_operands = 3 : i64, tpu.core_type = #tpu.core_type<tc>} {
    %0 = tpu.iota {dimensions = array<i32: 1>} : vector<1x256xi32>
    %c128_i32 = arith.constant 128 : i32
    %c0_i32 = arith.constant 0 : i32
    %1 = arith.cmpi eq, %c128_i32, %c0_i32 : i32
    %c1_i32 = arith.constant 1 : i32
    %2 = arith.select %1, %c1_i32, %c128_i32 : i32
    %3 = vector.broadcast %2 : i32 to vector<1x256xi32>
    %4 = arith.remsi %0, %3 : vector<1x256xi32>
    %c0_i32_0 = arith.constant 0 : i32
    %5 = vector.broadcast %c0_i32_0 : i32 to vector<1x256xi32>
    %6 = arith.cmpi ne, %4, %5 : vector<1x256xi32>
    %c0_i32_1 = arith.constant 0 : i32
    %7 = vector.broadcast %c0_i32_1 : i32 to vector<1x256xi32>
    %8 = arith.cmpi slt, %4, %7 : vector<1x256xi32>
    %c0_i32_2 = arith.constant 0 : i32
    %9 = arith.cmpi slt, %2, %c0_i32_2 : i32
    %10 = vector.broadcast %9 : i1 to vector<1x256xi1>
    %11 = vector.broadcast %10 : vector<1x256xi1> to vector<1x256xi1>
    %12 = arith.xori %8, %11 : vector<1x256xi1>
    %13 = arith.andi %12, %6 : vector<1x256xi1>
    %14 = vector.broadcast %2 : i32 to vector<1x256xi32>
    %15 = arith.addi %4, %14 : vector<1x256xi32>
    %16 = arith.select %13, %15, %4 : vector<1x256xi1>, vector<1x256xi32>
    %c0_i32_3 = arith.constant 0 : i32
    %17 = vector.broadcast %c0_i32_3 : i32 to vector<1x256xi32>
    %18 = arith.cmpi eq, %16, %17 : vector<1x256xi32>
    %c127_i32 = arith.constant 127 : i32
    %19 = vector.broadcast %c127_i32 : i32 to vector<1x256xi32>
    %20 = arith.cmpi eq, %16, %19 : vector<1x256xi32>
    %c0 = arith.constant 0 : index
    %c0_4 = arith.constant 0 : index
    %c0_5 = arith.constant 0 : index
    %21 = vector.load %arg0[%c0, %c0_4, %c0_5] : memref<2x16x128xf32, #tpu.memory_space<vmem>>, vector<1x16x128xf32>
    %22 = vector.shape_cast %21 : vector<1x16x128xf32> to vector<16x128xf32>
    %c0_6 = arith.constant 0 : index
    %c0_7 = arith.constant 0 : index
    %23 = vector.load %arg12[%c0_6, %c0_7] : memref<16x256xf32, #tpu.memory_space<vmem>>, vector<16x128xf32>
    tpu.vector_store %arg12[%c0_6, %c0_7], %22 {strides = array<i32>} : memref<16x256xf32, #tpu.memory_space<vmem>>, vector<16x128xf32>,
    %c1 = arith.constant 1 : index
    %c0_8 = arith.constant 0 : index
    %c0_9 = arith.constant 0 : index
    %24 = vector.load %arg0[%c1, %c0_8, %c0_9] : memref<2x16x128xf32, #tpu.memory_space<vmem>>, vector<1x16x128xf32>
    %25 = vector.shape_cast %24 : vector<1x16x128xf32> to vector<16x128xf32>
    %c0_10 = arith.constant 0 : index
    %c128 = arith.constant 128 : index
    %26 = vector.load %arg12[%c0_10, %c128] : memref<16x256xf32, #tpu.memory_space<vmem>>, vector<16x128xf32>
    tpu.vector_store %arg12[%c0_10, %c128], %25 {strides = array<i32>} : memref<16x256xf32, #tpu.memory_space<vmem>>, vector<16x128xf32>,
    %c0_11 = arith.constant 0 : index
    %c0_12 = arith.constant 0 : index
    %27 = vector.load %arg12[%c0_11, %c0_12] : memref<16x256xf32, #tpu.memory_space<vmem>>, vector<16x256xf32>
    %28 = vector.extract_strided_slice %27 {offsets = [0, 255], sizes = [16, 1], strides = [1, 1]} : vector<16x256xf32> to vector<16x1xf32>
    %29 = vector.extract_strided_slice %27 {offsets = [0, 0], sizes = [16, 255], strides = [1, 1]} : vector<16x256xf32> to vector<16x255xf32>
    %30 = tpu.concatenate %28, %29 in 1 : vector<16x1xf32>, vector<16x255xf32> -> vector<16x256xf32>
    %cst = arith.constant 0.000000e+00 : f32
    %31 = vector.shape_cast %18 : vector<1x256xi1> to vector<1x256xi1>
    %32 = vector.broadcast %31 : vector<1x256xi1> to vector<16x256xi1>
    %33 = vector.broadcast %cst : f32 to vector<16x256xf32>
    %34 = arith.select %32, %33, %30 : vector<16x256xi1>, vector<16x256xf32>
    %35 = vector.extract_strided_slice %27 {offsets = [0, 1], sizes = [16, 255], strides = [1, 1]} : vector<16x256xf32> to vector<16x255xf32>
    %36 = vector.extract_strided_slice %27 {offsets = [0, 0], sizes = [16, 1], strides = [1, 1]} : vector<16x256xf32> to vector<16x1xf32>
    %37 = tpu.concatenate %35, %36 in 1 : vector<16x255xf32>, vector<16x1xf32> -> vector<16x256xf32>
    %cst_13 = arith.constant 0.000000e+00 : f32
    %38 = vector.shape_cast %20 : vector<1x256xi1> to vector<1x256xi1>
    %39 = vector.broadcast %38 : vector<1x256xi1> to vector<16x256xi1>
    %40 = vector.broadcast %cst_13 : f32 to vector<16x256xf32>
    %41 = arith.select %39, %40, %37 : vector<16x256xi1>, vector<16x256xf32>
    %42 = arith.truncf %34 : vector<16x256xf32> to vector<16x256xbf16>
    %c0_14 = arith.constant 0 : index
    %c0_15 = arith.constant 0 : index
    %43 = vector.load %arg13[%c0_14, %c0_15] : memref<48x256xbf16, #tpu.memory_space<vmem>>, vector<16x256xbf16>
    tpu.vector_store %arg13[%c0_14, %c0_15], %42 {strides = array<i32>} : memref<48x256xbf16, #tpu.memory_space<vmem>>, vector<16x256xbf16>,
    %44 = arith.truncf %27 : vector<16x256xf32> to vector<16x256xbf16>
    %c16 = arith.constant 16 : index
    %c0_16 = arith.constant 0 : index
    %45 = vector.load %arg13[%c16, %c0_16] : memref<48x256xbf16, #tpu.memory_space<vmem>>, vector<16x256xbf16>
    tpu.vector_store %arg13[%c16, %c0_16], %44 {strides = array<i32>} : memref<48x256xbf16, #tpu.memory_space<vmem>>, vector<16x256xbf16>,
    %46 = arith.truncf %41 : vector<16x256xf32> to vector<16x256xbf16>
    %c32 = arith.constant 32 : index
    %c0_17 = arith.constant 0 : index
    %47 = vector.load %arg13[%c32, %c0_17] : memref<48x256xbf16, #tpu.memory_space<vmem>>, vector<16x256xbf16>
    tpu.vector_store %arg13[%c32, %c0_17], %46 {strides = array<i32>} : memref<48x256xbf16, #tpu.memory_space<vmem>>, vector<16x256xbf16>,
    %c0_18 = arith.constant 0 : index
    %c0_19 = arith.constant 0 : index
    %48 = vector.load %arg1[%c0_18, %c0_19] : memref<16x48xbf16, #tpu.memory_space<vmem>>, vector<16x48xbf16>
    %c0_20 = arith.constant 0 : index
    %c0_21 = arith.constant 0 : index
    %49 = vector.load %arg13[%c0_20, %c0_21] : memref<48x256xbf16, #tpu.memory_space<vmem>>, vector<48x256xbf16>
    %cst_22 = arith.constant dense<0.000000e+00> : vector<16x256xf32>
    %50 = tpu.matmul %48, %49, %cst_22 {dimension_numbers = #tpu.dot_dimension_numbers<[1], [0], [0], [1], [0, 0, 1, 1], [], []>} : vector<16x48xbf16>, vector<48x256xbf16>, vector<16x256xf32> -> vector<16x256xf32>
    %c0_23 = arith.constant 0 : index
    %c0_24 = arith.constant 0 : index
    %51 = vector.load %arg14[%c0_23, %c0_24] : memref<32x256xf32, #tpu.memory_space<vmem>>, vector<16x256xf32>
    tpu.vector_store %arg14[%c0_23, %c0_24], %50 {strides = array<i32>} : memref<32x256xf32, #tpu.memory_space<vmem>>, vector<16x256xf32>,
    %52 = arith.mulf %50, %50 : vector<16x256xf32>
    %c16_25 = arith.constant 16 : index
    %c0_26 = arith.constant 0 : index
    %53 = vector.load %arg14[%c16_25, %c0_26] : memref<32x256xf32, #tpu.memory_space<vmem>>, vector<16x256xf32>
    tpu.vector_store %arg14[%c16_25, %c0_26], %52 {strides = array<i32>} : memref<32x256xf32, #tpu.memory_space<vmem>>, vector<16x256xf32>,
    %c0_27 = arith.constant 0 : index
    %c0_28 = arith.constant 0 : index
    %54 = vector.load %arg14[%c0_27, %c0_28] : memref<32x256xf32, #tpu.memory_space<vmem>>, vector<32x256xf32>
    %cst_29 = arith.constant dense<0.000000e+00> : vector<32xf32>
    %55 = vector.multi_reduction <add>, %54, %cst_29 [1] : vector<32x256xf32> to vector<32xf32>
    %56 = vector.shape_cast %55 : vector<32xf32> to vector<32x1xf32>
    %cst_30 = arith.constant 3.906250e-03 : f32
    %57 = vector.broadcast %cst_30 : f32 to vector<32x1xf32>
    %58 = arith.mulf %56, %57 : vector<32x1xf32>
    %59 = vector.extract_strided_slice %58 {offsets = [0, 0], sizes = [16, 1], strides = [1, 1]} : vector<32x1xf32> to vector<16x1xf32>
    %60 = vector.extract_strided_slice %58 {offsets = [16, 0], sizes = [16, 1], strides = [1, 1]} : vector<32x1xf32> to vector<16x1xf32>
    %61 = arith.mulf %59, %59 : vector<16x1xf32>
    %62 = arith.subf %60, %61 : vector<16x1xf32>
    %c0_31 = arith.constant 0 : index
    %c0_32 = arith.constant 0 : index
    %63 = vector.load %arg2[%c0_31, %c0_32] : memref<16x1xf32, #tpu.memory_space<vmem>>, vector<16x1xf32>
    %cst_33 = arith.constant 9.99999974E-6 : f32
    %64 = vector.broadcast %cst_33 : f32 to vector<16x1xf32>
    %65 = arith.addf %62, %64 : vector<16x1xf32>
    %66 = math.rsqrt %65 : vector<16x1xf32>
    %67 = arith.mulf %63, %66 : vector<16x1xf32>
    %c0_34 = arith.constant 0 : index
    %c0_35 = arith.constant 0 : index
    %68 = vector.load %arg3[%c0_34, %c0_35] : memref<16x1xf32, #tpu.memory_space<vmem>>, vector<16x1xf32>
    %69 = arith.mulf %59, %67 : vector<16x1xf32>
    %70 = arith.subf %68, %69 : vector<16x1xf32>
    %71 = vector.broadcast %67 : vector<16x1xf32> to vector<16x256xf32>
    %72 = arith.mulf %50, %71 : vector<16x256xf32>
    %73 = vector.broadcast %70 : vector<16x1xf32> to vector<16x256xf32>
    %74 = arith.addf %72, %73 : vector<16x256xf32>
    %cst_36 = arith.constant 0.000000e+00 : f32
    %75 = vector.broadcast %cst_36 : f32 to vector<16x256xf32>
    %76 = arith.maximumf %74, %75 : vector<16x256xf32>
    %77 = vector.extract_strided_slice %76 {offsets = [0, 255], sizes = [16, 1], strides = [1, 1]} : vector<16x256xf32> to vector<16x1xf32>
    %78 = vector.extract_strided_slice %76 {offsets = [0, 0], sizes = [16, 255], strides = [1, 1]} : vector<16x256xf32> to vector<16x255xf32>
    %79 = tpu.concatenate %77, %78 in 1 : vector<16x1xf32>, vector<16x255xf32> -> vector<16x256xf32>
    %cst_37 = arith.constant 0.000000e+00 : f32
    %80 = vector.shape_cast %18 : vector<1x256xi1> to vector<1x256xi1>
    %81 = vector.broadcast %80 : vector<1x256xi1> to vector<16x256xi1>
    %82 = vector.broadcast %cst_37 : f32 to vector<16x256xf32>
    %83 = arith.select %81, %82, %79 : vector<16x256xi1>, vector<16x256xf32>
    %84 = vector.extract_strided_slice %76 {offsets = [0, 1], sizes = [16, 255], strides = [1, 1]} : vector<16x256xf32> to vector<16x255xf32>
    %85 = vector.extract_strided_slice %76 {offsets = [0, 0], sizes = [16, 1], strides = [1, 1]} : vector<16x256xf32> to vector<16x1xf32>
    %86 = tpu.concatenate %84, %85 in 1 : vector<16x255xf32>, vector<16x1xf32> -> vector<16x256xf32>
    %cst_38 = arith.constant 0.000000e+00 : f32
    %87 = vector.shape_cast %20 : vector<1x256xi1> to vector<1x256xi1>
    %88 = vector.broadcast %87 : vector<1x256xi1> to vector<16x256xi1>
    %89 = vector.broadcast %cst_38 : f32 to vector<16x256xf32>
    %90 = arith.select %88, %89, %86 : vector<16x256xi1>, vector<16x256xf32>
    %91 = arith.truncf %83 : vector<16x256xf32> to vector<16x256xbf16>
    %c0_39 = arith.constant 0 : index
    %c0_40 = arith.constant 0 : index
    %92 = vector.load %arg13[%c0_39, %c0_40] : memref<48x256xbf16, #tpu.memory_space<vmem>>, vector<16x256xbf16>
    tpu.vector_store %arg13[%c0_39, %c0_40], %91 {strides = array<i32>} : memref<48x256xbf16, #tpu.memory_space<vmem>>, vector<16x256xbf16>,
    %93 = arith.truncf %76 : vector<16x256xf32> to vector<16x256xbf16>
    %c16_41 = arith.constant 16 : index
    %c0_42 = arith.constant 0 : index
    %94 = vector.load %arg13[%c16_41, %c0_42] : memref<48x256xbf16, #tpu.memory_space<vmem>>, vector<16x256xbf16>
    tpu.vector_store %arg13[%c16_41, %c0_42], %93 {strides = array<i32>} : memref<48x256xbf16, #tpu.memory_space<vmem>>, vector<16x256xbf16>,
    %95 = arith.truncf %90 : vector<16x256xf32> to vector<16x256xbf16>
    %c32_43 = arith.constant 32 : index
    %c0_44 = arith.constant 0 : index
    %96 = vector.load %arg13[%c32_43, %c0_44] : memref<48x256xbf16, #tpu.memory_space<vmem>>, vector<16x256xbf16>
    tpu.vector_store %arg13[%c32_43, %c0_44], %95 {strides = array<i32>} : memref<48x256xbf16, #tpu.memory_space<vmem>>, vector<16x256xbf16>,
    %c0_45 = arith.constant 0 : index
    %c0_46 = arith.constant 0 : index
    %97 = vector.load %arg4[%c0_45, %c0_46] : memref<16x48xbf16, #tpu.memory_space<vmem>>, vector<16x48xbf16>
    %c0_47 = arith.constant 0 : index
    %c0_48 = arith.constant 0 : index
    %98 = vector.load %arg13[%c0_47, %c0_48] : memref<48x256xbf16, #tpu.memory_space<vmem>>, vector<48x256xbf16>
    %cst_49 = arith.constant dense<0.000000e+00> : vector<16x256xf32>
    %99 = tpu.matmul %97, %98, %cst_49 {dimension_numbers = #tpu.dot_dimension_numbers<[1], [0], [0], [1], [0, 0, 1, 1], [], []>} : vector<16x48xbf16>, vector<48x256xbf16>, vector<16x256xf32> -> vector<16x256xf32>
    %c0_50 = arith.constant 0 : index
    %c0_51 = arith.constant 0 : index
    %100 = vector.load %arg14[%c0_50, %c0_51] : memref<32x256xf32, #tpu.memory_space<vmem>>, vector<16x256xf32>
    tpu.vector_store %arg14[%c0_50, %c0_51], %99 {strides = array<i32>} : memref<32x256xf32, #tpu.memory_space<vmem>>, vector<16x256xf32>,
    %101 = arith.mulf %99, %99 : vector<16x256xf32>
    %c16_52 = arith.constant 16 : index
    %c0_53 = arith.constant 0 : index
    %102 = vector.load %arg14[%c16_52, %c0_53] : memref<32x256xf32, #tpu.memory_space<vmem>>, vector<16x256xf32>
    tpu.vector_store %arg14[%c16_52, %c0_53], %101 {strides = array<i32>} : memref<32x256xf32, #tpu.memory_space<vmem>>, vector<16x256xf32>,
    %c0_54 = arith.constant 0 : index
    %c0_55 = arith.constant 0 : index
    %103 = vector.load %arg14[%c0_54, %c0_55] : memref<32x256xf32, #tpu.memory_space<vmem>>, vector<32x256xf32>
    %cst_56 = arith.constant dense<0.000000e+00> : vector<32xf32>
    %104 = vector.multi_reduction <add>, %103, %cst_56 [1] : vector<32x256xf32> to vector<32xf32>
    %105 = vector.shape_cast %104 : vector<32xf32> to vector<32x1xf32>
    %cst_57 = arith.constant 3.906250e-03 : f32
    %106 = vector.broadcast %cst_57 : f32 to vector<32x1xf32>
    %107 = arith.mulf %105, %106 : vector<32x1xf32>
    %108 = vector.extract_strided_slice %107 {offsets = [0, 0], sizes = [16, 1], strides = [1, 1]} : vector<32x1xf32> to vector<16x1xf32>
    %109 = vector.extract_strided_slice %107 {offsets = [16, 0], sizes = [16, 1], strides = [1, 1]} : vector<32x1xf32> to vector<16x1xf32>
    %110 = arith.mulf %108, %108 : vector<16x1xf32>
    %111 = arith.subf %109, %110 : vector<16x1xf32>
    %c0_58 = arith.constant 0 : index
    %c0_59 = arith.constant 0 : index
    %112 = vector.load %arg5[%c0_58, %c0_59] : memref<16x1xf32, #tpu.memory_space<vmem>>, vector<16x1xf32>
    %cst_60 = arith.constant 9.99999974E-6 : f32
    %113 = vector.broadcast %cst_60 : f32 to vector<16x1xf32>
    %114 = arith.addf %111, %113 : vector<16x1xf32>
    %115 = math.rsqrt %114 : vector<16x1xf32>
    %116 = arith.mulf %112, %115 : vector<16x1xf32>
    %c0_61 = arith.constant 0 : index
    %c0_62 = arith.constant 0 : index
    %117 = vector.load %arg6[%c0_61, %c0_62] : memref<16x1xf32, #tpu.memory_space<vmem>>, vector<16x1xf32>
    %118 = arith.mulf %108, %116 : vector<16x1xf32>
    %119 = arith.subf %117, %118 : vector<16x1xf32>
    %120 = vector.broadcast %116 : vector<16x1xf32> to vector<16x256xf32>
    %121 = arith.mulf %99, %120 : vector<16x256xf32>
    %122 = vector.broadcast %119 : vector<16x1xf32> to vector<16x256xf32>
    %123 = arith.addf %121, %122 : vector<16x256xf32>
    %cst_63 = arith.constant 0.000000e+00 : f32
    %124 = vector.broadcast %cst_63 : f32 to vector<16x256xf32>
    %125 = arith.maximumf %123, %124 : vector<16x256xf32>
    %126 = vector.extract_strided_slice %125 {offsets = [0, 0], sizes = [16, 128], strides = [1, 1]} : vector<16x256xf32> to vector<16x128xf32>
    %cst_64 = arith.constant dense<0.000000e+00> : vector<16xf32>
    %127 = vector.multi_reduction <add>, %126, %cst_64 [1] : vector<16x128xf32> to vector<16xf32>
    %128 = vector.shape_cast %127 : vector<16xf32> to vector<16x1xf32>
    %cst_65 = arith.constant 7.812500e-03 : f32
    %129 = vector.broadcast %cst_65 : f32 to vector<16x1xf32>
    %130 = arith.mulf %128, %129 : vector<16x1xf32>
    %131 = vector.extract_strided_slice %125 {offsets = [0, 128], sizes = [16, 128], strides = [1, 1]} : vector<16x256xf32> to vector<16x128xf32>
    %cst_66 = arith.constant dense<0.000000e+00> : vector<16xf32>
    %132 = vector.multi_reduction <add>, %131, %cst_66 [1] : vector<16x128xf32> to vector<16xf32>
    %133 = vector.shape_cast %132 : vector<16xf32> to vector<16x1xf32>
    %cst_67 = arith.constant 7.812500e-03 : f32
    %134 = vector.broadcast %cst_67 : f32 to vector<16x1xf32>
    %135 = arith.mulf %133, %134 : vector<16x1xf32>
    %136 = tpu.concatenate %130, %135 in 1 : vector<16x1xf32>, vector<16x1xf32> -> vector<16x2xf32>
    %c0_68 = arith.constant 0 : index
    %c0_69 = arith.constant 0 : index
    %137 = vector.load %arg7[%c0_68, %c0_69] : memref<2x16xbf16, #tpu.memory_space<vmem>>, vector<2x16xbf16>
    %138 = arith.truncf %136 : vector<16x2xf32> to vector<16x2xbf16>
    %cst_70 = arith.constant dense<0.000000e+00> : vector<2x2xf32>
    %139 = tpu.matmul %137, %138, %cst_70 {dimension_numbers = #tpu.dot_dimension_numbers<[1], [0], [0], [1], [0, 0, 1, 1], [], []>} : vector<2x16xbf16>, vector<16x2xbf16>, vector<2x2xf32> -> vector<2x2xf32>
    %c0_71 = arith.constant 0 : index
    %c0_72 = arith.constant 0 : index
    %140 = vector.load %arg8[%c0_71, %c0_72] : memref<2x1xf32, #tpu.memory_space<vmem>>, vector<2x1xf32>
    %141 = vector.broadcast %140 : vector<2x1xf32> to vector<2x2xf32>
    %142 = arith.addf %139, %141 : vector<2x2xf32>
    %cst_73 = arith.constant 0.000000e+00 : f32
    %143 = vector.broadcast %cst_73 : f32 to vector<2x2xf32>
    %144 = arith.maximumf %142, %143 : vector<2x2xf32>
    %c0_74 = arith.constant 0 : index
    %c0_75 = arith.constant 0 : index
    %145 = vector.load %arg9[%c0_74, %c0_75] : memref<16x2xbf16, #tpu.memory_space<vmem>>, vector<16x2xbf16>
    %146 = arith.truncf %144 : vector<2x2xf32> to vector<2x2xbf16>
    %cst_76 = arith.constant dense<0.000000e+00> : vector<16x2xf32>
    %147 = tpu.matmul %145, %146, %cst_76 {dimension_numbers = #tpu.dot_dimension_numbers<[1], [0], [0], [1], [0, 0, 1, 1], [], []>} : vector<16x2xbf16>, vector<2x2xbf16>, vector<16x2xf32> -> vector<16x2xf32>
    %c0_77 = arith.constant 0 : index
    %c0_78 = arith.constant 0 : index
    %148 = vector.load %arg10[%c0_77, %c0_78] : memref<16x1xf32, #tpu.memory_space<vmem>>, vector<16x1xf32>
    %149 = vector.broadcast %148 : vector<16x1xf32> to vector<16x2xf32>
    %150 = arith.addf %147, %149 : vector<16x2xf32>
    %151 = arith.negf %150 : vector<16x2xf32>
    %152 = math.exp %151 : vector<16x2xf32>
    %cst_79 = arith.constant 1.000000e+00 : f32
    %153 = vector.broadcast %cst_79 : f32 to vector<16x2xf32>
    %154 = arith.addf %153, %152 : vector<16x2xf32>
    %155 = arith.divf %153, %154 : vector<16x2xf32>
    %156 = vector.extract_strided_slice %155 {offsets = [0, 0], sizes = [16, 1], strides = [1, 1]} : vector<16x2xf32> to vector<16x1xf32>
    %157 = vector.shape_cast %156 : vector<16x1xf32> to vector<16x1xf32>
    %158 = vector.broadcast %157 : vector<16x1xf32> to vector<16x128xf32>
    %159 = vector.extract_strided_slice %155 {offsets = [0, 1], sizes = [16, 1], strides = [1, 1]} : vector<16x2xf32> to vector<16x1xf32>
    %160 = vector.shape_cast %159 : vector<16x1xf32> to vector<16x1xf32>
    %161 = vector.broadcast %160 : vector<16x1xf32> to vector<16x128xf32>
    %162 = arith.addf %27, %125 : vector<16x256xf32>
    %163 = vector.extract_strided_slice %162 {offsets = [0, 0], sizes = [16, 128], strides = [1, 1]} : vector<16x256xf32> to vector<16x128xf32>
    %164 = arith.addf %163, %158 : vector<16x128xf32>
    %c0_80 = arith.constant 0 : index
    %c0_81 = arith.constant 0 : index
    %c0_82 = arith.constant 0 : index
    %165 = vector.load %arg11[%c0_80, %c0_81, %c0_82] : memref<2x16x128xf32, #tpu.memory_space<vmem>>, vector<1x16x128xf32>
    %166 = vector.shape_cast %165 : vector<1x16x128xf32> to vector<16x128xf32>
    %167 = vector.shape_cast %164 : vector<16x128xf32> to vector<1x16x128xf32>
    tpu.vector_store %arg11[%c0_80, %c0_81, %c0_82], %167 {strides = array<i32>} : memref<2x16x128xf32, #tpu.memory_space<vmem>>, vector<1x16x128xf32>,
    %168 = vector.extract_strided_slice %162 {offsets = [0, 128], sizes = [16, 128], strides = [1, 1]} : vector<16x256xf32> to vector<16x128xf32>
    %169 = arith.addf %168, %161 : vector<16x128xf32>
    %c1_83 = arith.constant 1 : index
    %c0_84 = arith.constant 0 : index
    %c0_85 = arith.constant 0 : index
    %170 = vector.load %arg11[%c1_83, %c0_84, %c0_85] : memref<2x16x128xf32, #tpu.memory_space<vmem>>, vector<1x16x128xf32>
    %171 = vector.shape_cast %170 : vector<1x16x128xf32> to vector<16x128xf32>
    %172 = vector.shape_cast %169 : vector<16x128xf32> to vector<1x16x128xf32>
    tpu.vector_store %arg11[%c1_83, %c0_84, %c0_85], %172 {strides = array<i32>} : memref<2x16x128xf32, #tpu.memory_space<vmem>>, vector<1x16x128xf32>,
    return
  }
}

</mosaic_0001>

<llo_original>
// kernel: tpu_custom_call.1
$region0: #{tpu_custom_call.1}
  #allocation0 [shape = 'u32[]', space=smem, size = 0x4, offset = 0x4, fixed_abs, tag = 'smem constant byte address 0x4 - core index']
  #allocation1 [shape = 'u32[144,128]{1,0:T(1,128)}', space=vmem, size = 0x12000, scoped, tag = 'internal scratch']
  #allocation2 [shape = 'f32[16,256]{1,0:T(8,128)}', space=vmem, size = 0x4000, scoped, tag = 'scratch operand']
  #allocation3 [shape = 'bf16[48,256]{1,0:T(8,128)(2,1)}', space=vmem, size = 0x6000, scoped, tag = 'scratch operand']
  #allocation4 [shape = 'f32[32,256]{1,0:T(8,128)}', space=vmem, size = 0x8000, scoped, tag = 'scratch operand']
  %s0 = inlined_call_operand.vmem [shape: f32[2,16,128], index: 0, kind: input, shape index: {}]
  %s1 = inlined_call_operand.vmem [shape: bf16[16,48], index: 1, kind: input, shape index: {}]
  %s2 = inlined_call_operand.vmem [shape: f32[16,1], index: 2, kind: input, shape index: {}]
  %s3 = inlined_call_operand.vmem [shape: f32[16,1], index: 3, kind: input, shape index: {}]
  %s4 = inlined_call_operand.vmem [shape: bf16[16,48], index: 4, kind: input, shape index: {}]
  %s5 = inlined_call_operand.vmem [shape: f32[16,1], index: 5, kind: input, shape index: {}]
  %s6 = inlined_call_operand.vmem [shape: f32[16,1], index: 6, kind: input, shape index: {}]
  %s7 = inlined_call_operand.vmem [shape: bf16[2,16], index: 7, kind: input, shape index: {}]
  %s8 = inlined_call_operand.vmem [shape: f32[2,1], index: 8, kind: input, shape index: {}]
  %s9 = inlined_call_operand.vmem [shape: bf16[16,2], index: 9, kind: input, shape index: {}]
  %s10 = inlined_call_operand.vmem [shape: f32[16,1], index: 10, kind: input, shape index: {}]
  %s11 = inlined_call_operand.hbm [shape: f32[2,16,128], index: 11, kind: output, shape index: {}]
  %s12 = sld [smem:[#allocation0]]
  $region54: #{tpu_custom_call.1} parent=0
    _
  %s14 = ssub.s32 1, %s12
  %s15 = scalar_select 0, %s14, %s12
  $region1: #{tpu_custom_call.1} parent=0
    #allocation5 [shape = 'u8[16384]{0}', space=vmem, size = 0x4000, scoped, tag = 'output window, operand 0, single buffered']
    #allocation6 [shape = 's32[1]{0}', space=sflag, size = 0x4, scoped, tag = 'scoped memory for tpu_custom_call.1']
    %16 = vsyncpa [#allocation6], 0
    // Predicated region
    $region2: #{tpu_custom_call.1} parent=1 // pred_check
      _
    $region3: #{tpu_custom_call.1} parent=1 // pred_check_branch
      %18 = sbr.rel (0) target = $region5
    $region4: #{tpu_custom_call.1} parent=1 // pred_region
      _
    $region5: #{tpu_custom_call.1} parent=1 // pred_fallthru
      _
    // Predicated region
    $region6: #{tpu_custom_call.1} parent=1 // pred_check
      _
    $region7: #{tpu_custom_call.1} parent=1 // pred_check_branch
      %20 = sbr.rel (0) target = $region9
    $region8: #{tpu_custom_call.1} parent=1 // pred_region
      _
    $region9: #{tpu_custom_call.1} parent=1 // pred_fallthru
      _
    // Predicated region
    $region10: #{tpu_custom_call.1} parent=1 // pred_check
      _
    $region11: #{tpu_custom_call.1} parent=1 // pred_check_branch
      %22 = sbr.rel (0) target = $region13
    $region12: #{tpu_custom_call.1} parent=1 // pred_region
      _
    $region13: #{tpu_custom_call.1} parent=1 // pred_fallthru
      _
    // Predicated region
    $region14: #{tpu_custom_call.1} parent=1 // pred_check
      _
    $region15: #{tpu_custom_call.1} parent=1 // pred_check_branch
      %24 = sbr.rel (0) target = $region17
    $region16: #{tpu_custom_call.1} parent=1 // pred_region
      _
    $region17: #{tpu_custom_call.1} parent=1 // pred_fallthru
      _
    // Predicated region
    $region18: #{tpu_custom_call.1} parent=1 // pred_check
      _
    $region19: #{tpu_custom_call.1} parent=1 // pred_check_branch
      %26 = sbr.rel (0) target = $region21
    $region20: #{tpu_custom_call.1} parent=1 // pred_region
      _
    $region21: #{tpu_custom_call.1} parent=1 // pred_fallthru
      _
    // Predicated region
    $region22: #{tpu_custom_call.1} parent=1 // pred_check
      _
    $region23: #{tpu_custom_call.1} parent=1 // pred_check_branch
      %28 = sbr.rel (0) target = $region25
    $region24: #{tpu_custom_call.1} parent=1 // pred_region
      _
    $region25: #{tpu_custom_call.1} parent=1 // pred_fallthru
      _
    // Predicated region
    $region26: #{tpu_custom_call.1} parent=1 // pred_check
      _
    $region27: #{tpu_custom_call.1} parent=1 // pred_check_branch
      %30 = sbr.rel (0) target = $region29
    $region28: #{tpu_custom_call.1} parent=1 // pred_region
      _
    $region29: #{tpu_custom_call.1} parent=1 // pred_fallthru
      _
    // Predicated region
    $region30: #{tpu_custom_call.1} parent=1 // pred_check
      _
    $region31: #{tpu_custom_call.1} parent=1 // pred_check_branch
      %32 = sbr.rel (0) target = $region33
    $region32: #{tpu_custom_call.1} parent=1 // pred_region
      _
    $region33: #{tpu_custom_call.1} parent=1 // pred_fallthru
      _
    // Predicated region
    $region34: #{tpu_custom_call.1} parent=1 // pred_check
      _
    $region35: #{tpu_custom_call.1} parent=1 // pred_check_branch
      %34 = sbr.rel (0) target = $region37
    $region36: #{tpu_custom_call.1} parent=1 // pred_region
      _
    $region37: #{tpu_custom_call.1} parent=1 // pred_fallthru
      _
    // Predicated region
    $region38: #{tpu_custom_call.1} parent=1 // pred_check
      _
    $region39: #{tpu_custom_call.1} parent=1 // pred_check_branch
      %36 = sbr.rel (0) target = $region41
    $region40: #{tpu_custom_call.1} parent=1 // pred_region
      _
    $region41: #{tpu_custom_call.1} parent=1 // pred_fallthru
      _
    // Predicated region
    $region42: #{tpu_custom_call.1} parent=1 // pred_check
      _
    $region43: #{tpu_custom_call.1} parent=1 // pred_check_branch
      %38 = sbr.rel (0) target = $region45
    $region44: #{tpu_custom_call.1} parent=1 // pred_region
      _
    $region45: #{tpu_custom_call.1} parent=1 // pred_fallthru
      _
    %v40 = vlaneseq
    %v41 = vand.u32 %v40, 127
    %v42 = vadd.s32 %v41, 128
    %vm43 = vcmp.lt.s32.totalorder %v41, 0
    %v44 = vsub.s32 0, %v41
    %v45 = vsel %vm43, %v44, %v41
    %v46 = vshrl.u32 %v45, 7
    %v47 = vand.u32 %v45, 127
    %v48 = vsub.s32 0, %v47
    %v49 = vsel %vm43, %v48, %v47
    %vm50 = vcmp.lt.s32.totalorder %v42, 0
    %v51 = vsub.s32 0, %v42
    %v52 = vsel %vm50, %v51, %v42
    %v53 = vshrl.u32 %v52, 7
    %v54 = vand.u32 %v52, 127
    %v55 = vsub.s32 0, %v54
    %v56 = vsel %vm50, %v55, %v54
    %vm57 = vcmp.ne.s32.totalorder %v49, 0
    %vm58 = vcmp.ne.s32.totalorder %v56, 0
    %vm59 = vcmp.lt.s32.totalorder %v49, 0
    %vm60 = vcmp.lt.s32.totalorder %v56, 0
    %vm61 = vmand %vm59, %vm57
    %vm62 = vmand %vm60, %vm58
    %v63 = vadd.s32 %v49, 128
    %v64 = vadd.s32 %v56, 128
    %v65 = vsel %vm61, %v63, %v49
    %v66 = vsel %vm62, %v64, %v56
    %vm67 = vcmp.eq.s32.totalorder %v65, 0
    %vm68 = vcmp.eq.s32.totalorder %v66, 0
    %vm69 = vcmp.eq.s32.totalorder %v65, 127
    %vm70 = vcmp.eq.s32.totalorder %v66, 127
    %v71 = vld [vmem:[%s0] sm:$0xff]
    %v72 = vld [vmem:[%s0 + $0x8] sm:$0xff]
    %73 = vst [vmem:[#allocation2] sm:$0xff] %v71
    %74 = vst [vmem:[#allocation2 + $0x10] sm:$0xff] %v72
    %s75 = scalar_lea.vmem %s0, 16
    %v76 = vld [vmem:[%s75] sm:$0xff]
    %v77 = vld [vmem:[%s75 + $0x8] sm:$0xff]
    %78 = vst [vmem:[#allocation2 + $0x8] sm:$0xff] %v76
    %79 = vst [vmem:[#allocation2 + $0x18] sm:$0xff] %v77
    %v80 = vld [vmem:[#allocation2] sm:$0xff]
    %v81 = vld [vmem:[#allocation2 + $0x8] sm:$0xff]
    %v82 = vld [vmem:[#allocation2 + $0x10] sm:$0xff]
    %v83 = vld [vmem:[#allocation2 + $0x18] sm:$0xff]
    %86 = vrot.lane.b32.xlu0 %v81, 1
    %v87 = vpop.permute.xlu0 %86
    %88 = vrot.lane.b32.xlu0 %v83, 1
    %v89 = vpop.permute.xlu0 %88
    %94 = vrot.lane.b32.xlu0 %v80, 1
    %v95 = vpop.permute.xlu0 %94
    %96 = vrot.lane.b32.xlu0 %v82, 1
    %v97 = vpop.permute.xlu0 %96
    %vm98 = vcmask 7168
    %v99 = vsel %vm98, %v95, %v87
    %v100 = vsel %vm98, %v97, %v89
    %v105 = vsel %vm98, %v87, %v95
    %v106 = vsel %vm98, %v89, %v97
    %v107 = vsel %vm67, 1, 0
    %v108 = vsel %vm68, 1, 0
    %vm109 = vcmp.eq.s32.totalorder %v107, 1
    %vm110 = vcmp.eq.s32.totalorder %v108, 1
    %v111 = vsel %vm109, 0.0, %v105
    %v112 = vsel %vm110, 0.0, %v99
    %v113 = vsel %vm109, 0.0, %v106
    %v114 = vsel %vm110, 0.0, %v100
    %115 = vrot.lane.b32.xlu0 %v80, 127
    %v116 = vpop.permute.xlu0 %115
    %117 = vrot.lane.b32.xlu0 %v81, 127
    %v118 = vpop.permute.xlu0 %117
    %119 = vrot.lane.b32.xlu0 %v82, 127
    %v120 = vpop.permute.xlu0 %119
    %121 = vrot.lane.b32.xlu0 %v83, 127
    %v122 = vpop.permute.xlu0 %121
    %vm123 = vcmask 1039360
    %v124 = vsel %vm123, %v116, %v118
    %v125 = vsel %vm123, %v120, %v122
    %v132 = vsel %vm123, %v118, %v116
    %v133 = vsel %vm123, %v122, %v120
    %v134 = vsel %vm69, 1, 0
    %v135 = vsel %vm70, 1, 0
    %vm136 = vcmp.eq.s32.totalorder %v134, 1
    %vm137 = vcmp.eq.s32.totalorder %v135, 1
    %v138 = vsel %vm136, 0.0, %v124
    %v139 = vsel %vm137, 0.0, %v132
    %v140 = vsel %vm136, 0.0, %v125
    %v141 = vsel %vm137, 0.0, %v133
    %v142 = vpack.c.bf16 %v113, %v111
    %v143 = vpack.c.bf16 %v114, %v112
    %v146 = vunpack.c.l.b16 %v142
    %v147 = vunpack.c.l.b16 %v143
    %v148 = vunpack.c.h.b16 %v142
    %v149 = vunpack.c.h.b16 %v143
    %v150 = vpack.c.b16 %v147, %v146
    %v151 = vpack.c.b16 %v149, %v148
    %154 = vst [vmem:[#allocation3] sm:$0xff] %v150
    %155 = vst [vmem:[#allocation3 + $0x8] sm:$0xff] %v151
    %v156 = vpack.c.bf16 %v82, %v80
    %v157 = vpack.c.bf16 %v83, %v81
    %v160 = vunpack.c.l.b16 %v156
    %v161 = vunpack.c.l.b16 %v157
    %v162 = vunpack.c.h.b16 %v156
    %v163 = vunpack.c.h.b16 %v157
    %v164 = vpack.c.b16 %v161, %v160
    %v165 = vpack.c.b16 %v163, %v162
    %168 = vst [vmem:[#allocation3 + $0x10] sm:$0xff] %v164
    %169 = vst [vmem:[#allocation3 + $0x18] sm:$0xff] %v165
    %v170 = vpack.c.bf16 %v140, %v138
    %v171 = vpack.c.bf16 %v141, %v139
    %v174 = vunpack.c.l.b16 %v170
    %v175 = vunpack.c.l.b16 %v171
    %v176 = vunpack.c.h.b16 %v170
    %v177 = vunpack.c.h.b16 %v171
    %v178 = vpack.c.b16 %v175, %v174
    %v179 = vpack.c.b16 %v177, %v176
    %182 = vst [vmem:[#allocation3 + $0x20] sm:$0xff] %v178
    %183 = vst [vmem:[#allocation3 + $0x28] sm:$0xff] %v179
    %v184 = vld [vmem:[%s1] sm:$0xf]
    %v185 = vld [vmem:[%s1 + $0x4] sm:$0xf]
    %v186 = vld [vmem:[#allocation3] sm:$0xff]
    %v187 = vld [vmem:[#allocation3 + $0x8] sm:$0xff]
    %v188 = vld [vmem:[#allocation3 + $0x10] sm:$0xff]
    %v189 = vld [vmem:[#allocation3 + $0x18] sm:$0xff]
    %v190 = vld [vmem:[#allocation3 + $0x20] sm:$0xff]
    %v191 = vld [vmem:[#allocation3 + $0x28] sm:$0xff]
    %v194 = vunpack.c.l.b16 %v184
    %v195 = vunpack.c.l.b16 %v185
    %v196 = vpack.c.b16 %v195, %v194
    %v203 = vunpack.c.l.b16 %v186
    %v204 = vunpack.c.h.b16 %v186
    %v205 = vunpack.c.l.b16 %v187
    %v206 = vunpack.c.h.b16 %v187
    %v207 = vunpack.c.l.b16 %v188
    %v208 = vunpack.c.h.b16 %v188
    %v209 = vunpack.c.l.b16 %v189
    %v210 = vunpack.c.h.b16 %v189
    %v211 = vunpack.c.l.b16 %v190
    %v212 = vunpack.c.h.b16 %v190
    %v213 = vunpack.c.l.b16 %v191
    %v214 = vunpack.c.h.b16 %v191
    %v215 = vpack.c.b16 %v205, %v203
    %v216 = vpack.c.b16 %v206, %v204
    %v217 = vpack.c.b16 %v209, %v207
    %v218 = vpack.c.b16 %v210, %v208
    %v219 = vpack.c.b16 %v213, %v211
    %v220 = vpack.c.b16 %v214, %v212
    %vm227 = vcmask 392192
    %v229 = vsel %vm227, %v196, 0
    %231 = vmatprep.subr.bf16.mxu0 0
    %232 = vmatpush1.bf16.msra.mxu0 0
    %233 = vmatprep.subr.bf16.mxu0 0
    %234 = vmatpush1.bf16.msra.mxu0 0
    %235 = vmatprep.subr.bf16.mxu0 0
    %236 = vmatpush1.bf16.msra.mxu0 0
    %237 = vmatprep.subr.bf16.mxu0 0
    %238 = vmatpush1.bf16.msra.mxu0 0
    %239 = vmatprep.subr.bf16.mxu0 0
    %240 = vmatpush1.bf16.msra.mxu0 0
    %241 = vmatprep.subr.bf16.mxu0 %v220
    %242 = vmatpush1.bf16.msra.mxu0 %v219
    %243 = vmatprep.subr.bf16.mxu0 %v218
    %244 = vmatpush1.bf16.msra.mxu0 %v217
    %245 = vmatprep.subr.bf16.mxu0 %v216
    %246 = vmatpush1.bf16.msra.mxu0 %v215
    %247 = vmatprep.subr.bf16.mxu0 0
    %248 = vmatpush2.bf16.msra.mxu0 0
    %249 = vmatprep.subr.bf16.mxu0 0
    %250 = vmatpush2.bf16.msra.mxu0 0
    %251 = vmatprep.subr.bf16.mxu0 0
    %252 = vmatpush2.bf16.msra.mxu0 0
    %253 = vmatprep.subr.bf16.mxu0 0
    %254 = vmatpush2.bf16.msra.mxu0 0
    %255 = vmatprep.subr.bf16.mxu0 0
    %256 = vmatpush2.bf16.msra.mxu0 0
    %257 = vmatprep.subr.bf16.mxu0 0
    %258 = vmatpush2.bf16.msra.mxu0 0
    %259 = vmatprep.subr.bf16.mxu0 0
    %260 = vmatpush2.bf16.msra.mxu0 0
    %261 = vmatprep.subr.bf16.mxu0 0
    %262 = vmatpush2.bf16.msra.mxu0 0
    %263 = vmatprep.mubr.bf16.mxu0 0
    %264 = vmatmul.mubr.bf16.gmra.mxu0 %v229
    %v265 = vpop.f32.mrf.mxu0
    %v266 = vadd.f32 0.0, %v265
    %v267 = vpop.f32.mrf.mxu0
    %v268 = vadd.f32 0.0, %v267
    %v269 = vpop.f32.mrf.mxu0
    %v270 = vadd.f32 0.0, %v269
    %v271 = vpop.f32.mrf.mxu0
    %v272 = vadd.f32 0.0, %v271
    %273 = vdwg.mxu0
    %274 = vst [vmem:[#allocation4] sm:$0xff] %v266
    %275 = vst [vmem:[#allocation4 + $0x8] sm:$0xff] %v268
    %276 = vst [vmem:[#allocation4 + $0x10] sm:$0xff] %v270
    %277 = vst [vmem:[#allocation4 + $0x18] sm:$0xff] %v272
    %v278 = vmul.f32 %v266, %v266
    %v279 = vmul.f32 %v268, %v268
    %v280 = vmul.f32 %v270, %v270
    %v281 = vmul.f32 %v272, %v272
    %282 = vst [vmem:[#allocation4 + $0x20] sm:$0xff] %v278
    %283 = vst [vmem:[#allocation4 + $0x28] sm:$0xff] %v279
    %284 = vst [vmem:[#allocation4 + $0x30] sm:$0xff] %v280
    %285 = vst [vmem:[#allocation4 + $0x38] sm:$0xff] %v281
    %v286 = vld [vmem:[#allocation4] sm:$0xff]
    %v287 = vld [vmem:[#allocation4 + $0x8] sm:$0xff]
    %v288 = vld [vmem:[#allocation4 + $0x10] sm:$0xff]
    %v289 = vld [vmem:[#allocation4 + $0x18] sm:$0xff]
    %v290 = vld [vmem:[#allocation4 + $0x20] sm:$0xff]
    %v291 = vld [vmem:[#allocation4 + $0x28] sm:$0xff]
    %v292 = vld [vmem:[#allocation4 + $0x30] sm:$0xff]
    %v293 = vld [vmem:[#allocation4 + $0x38] sm:$0xff]
    %v294 = vadd.f32 %v286, %v287
    %295 = vadd.xlane.f32.xlu0 %v294
    %v296 = vpop.xlane.xlu0 %295
    %v297 = vadd.f32 %v288, %v289
    %298 = vadd.xlane.f32.xlu0 %v297
    %v299 = vpop.xlane.xlu0 %298
    %v300 = vadd.f32 %v290, %v291
    %301 = vadd.xlane.f32.xlu0 %v300
    %v302 = vpop.xlane.xlu0 %301
    %v303 = vadd.f32 %v292, %v293
    %304 = vadd.xlane.f32.xlu0 %v303
    %v305 = vpop.xlane.xlu0 %304
    %v306 = vmul.f32 %v296, 0.00390625
    %v307 = vmul.f32 %v299, 0.00390625
    %v308 = vmul.f32 %v302, 0.00390625
    %v309 = vmul.f32 %v305, 0.00390625
    %v310 = vmul.f32 %v306, %v306
    %v311 = vmul.f32 %v307, %v307
    %v312 = vsub.f32 %v308, %v310
    %v313 = vsub.f32 %v309, %v311
    %v314 = vld [vmem:[%s2] sm:$0xff]
    %v315 = vld [vmem:[%s2 + $0x8] sm:$0xff]
    %v316 = vadd.f32 %v312, 1e-05
    %v317 = vadd.f32 %v313, 1e-05
    %v318 = vrsqrt.pop %v316
    %v319 = vrsqrt.pop %v317
    %v320 = vmul.f32 %v314, %v318
    %v321 = vmul.f32 %v315, %v319
    %v322 = vld [vmem:[%s3] sm:$0xff]
    %v323 = vld [vmem:[%s3 + $0x8] sm:$0xff]
    %v324 = vmul.f32 %v306, %v320
    %v325 = vmul.f32 %v307, %v321
    %v326 = vsub.f32 %v322, %v324
    %v327 = vsub.f32 %v323, %v325
    %329 = vset.pattern.permute.xlu0 0
    %330 = vperm.xlu0 %329, %v320
    %v331 = vpop.permute.xlu0 %330
    %334 = vset.pattern.permute.xlu0 0
    %335 = vperm.xlu0 %334, %v321
    %v336 = vpop.permute.xlu0 %335
    %v338 = vmul.f32 %v266, %v331
    %v339 = vmul.f32 %v268, %v331
    %v340 = vmul.f32 %v270, %v336
    %v341 = vmul.f32 %v272, %v336
    %343 = vset.pattern.permute.xlu0 0
    %344 = vperm.xlu0 %343, %v326
    %v345 = vpop.permute.xlu0 %344
    %348 = vset.pattern.permute.xlu0 0
    %349 = vperm.xlu0 %348, %v327
    %v350 = vpop.permute.xlu0 %349
    %v352 = vadd.f32 %v338, %v345
    %v353 = vadd.f32 %v339, %v345
    %v354 = vadd.f32 %v340, %v350
    %v355 = vadd.f32 %v341, %v350
    %v356 = vmax.f32 %v352, 0.0
    %v357 = vmax.f32 %v353, 0.0
    %v358 = vmax.f32 %v354, 0.0
    %v359 = vmax.f32 %v355, 0.0
    %362 = vrot.lane.b32.xlu0 %v357, 1
    %v363 = vpop.permute.xlu0 %362
    %364 = vrot.lane.b32.xlu0 %v359, 1
    %v365 = vpop.permute.xlu0 %364
    %370 = vrot.lane.b32.xlu0 %v356, 1
    %v371 = vpop.permute.xlu0 %370
    %372 = vrot.lane.b32.xlu0 %v358, 1
    %v373 = vpop.permute.xlu0 %372
    %v374 = vsel %vm98, %v371, %v363
    %v375 = vsel %vm98, %v373, %v365
    %v380 = vsel %vm98, %v363, %v371
    %v381 = vsel %vm98, %v365, %v373
    %v382 = vsel %vm109, 0.0, %v380
    %v383 = vsel %vm110, 0.0, %v374
    %v384 = vsel %vm109, 0.0, %v381
    %v385 = vsel %vm110, 0.0, %v375
    %386 = vrot.lane.b32.xlu0 %v356, 127
    %v387 = vpop.permute.xlu0 %386
    %388 = vrot.lane.b32.xlu0 %v357, 127
    %v389 = vpop.permute.xlu0 %388
    %390 = vrot.lane.b32.xlu0 %v358, 127
    %v391 = vpop.permute.xlu0 %390
    %392 = vrot.lane.b32.xlu0 %v359, 127
    %v393 = vpop.permute.xlu0 %392
    %v394 = vsel %vm123, %v387, %v389
    %v395 = vsel %vm123, %v391, %v393
    %v402 = vsel %vm123, %v389, %v387
    %v403 = vsel %vm123, %v393, %v391
    %v404 = vsel %vm136, 0.0, %v394
    %v405 = vsel %vm137, 0.0, %v402
    %v406 = vsel %vm136, 0.0, %v395
    %v407 = vsel %vm137, 0.0, %v403
    %v408 = vpack.c.bf16 %v384, %v382
    %v409 = vpack.c.bf16 %v385, %v383
    %v412 = vunpack.c.l.b16 %v408
    %v413 = vunpack.c.l.b16 %v409
    %v414 = vunpack.c.h.b16 %v408
    %v415 = vunpack.c.h.b16 %v409
    %v416 = vpack.c.b16 %v413, %v412
    %v417 = vpack.c.b16 %v415, %v414
    %420 = vst [vmem:[#allocation3] sm:$0xff] %v416
    %421 = vst [vmem:[#allocation3 + $0x8] sm:$0xff] %v417
    %v422 = vpack.c.bf16 %v358, %v356
    %v423 = vpack.c.bf16 %v359, %v357
    %v426 = vunpack.c.l.b16 %v422
    %v427 = vunpack.c.l.b16 %v423
    %v428 = vunpack.c.h.b16 %v422
    %v429 = vunpack.c.h.b16 %v423
    %v430 = vpack.c.b16 %v427, %v426
    %v431 = vpack.c.b16 %v429, %v428
    %434 = vst [vmem:[#allocation3 + $0x10] sm:$0xff] %v430
    %435 = vst [vmem:[#allocation3 + $0x18] sm:$0xff] %v431
    %v436 = vpack.c.bf16 %v406, %v404
    %v437 = vpack.c.bf16 %v407, %v405
    %v440 = vunpack.c.l.b16 %v436
    %v441 = vunpack.c.l.b16 %v437
    %v442 = vunpack.c.h.b16 %v436
    %v443 = vunpack.c.h.b16 %v437
    %v444 = vpack.c.b16 %v441, %v440
    %v445 = vpack.c.b16 %v443, %v442
    %448 = vst [vmem:[#allocation3 + $0x20] sm:$0xff] %v444
    %449 = vst [vmem:[#allocation3 + $0x28] sm:$0xff] %v445
    %v450 = vld [vmem:[%s4] sm:$0xf]
    %v451 = vld [vmem:[%s4 + $0x4] sm:$0xf]
    %v452 = vld [vmem:[#allocation3] sm:$0xff]
    %v453 = vld [vmem:[#allocation3 + $0x8] sm:$0xff]
    %v454 = vld [vmem:[#allocation3 + $0x10] sm:$0xff]
    %v455 = vld [vmem:[#allocation3 + $0x18] sm:$0xff]
    %v456 = vld [vmem:[#allocation3 + $0x20] sm:$0xff]
    %v457 = vld [vmem:[#allocation3 + $0x28] sm:$0xff]
    %v460 = vunpack.c.l.b16 %v450
    %v461 = vunpack.c.l.b16 %v451
    %v462 = vpack.c.b16 %v461, %v460
    %v469 = vunpack.c.l.b16 %v452
    %v470 = vunpack.c.h.b16 %v452
    %v471 = vunpack.c.l.b16 %v453
    %v472 = vunpack.c.h.b16 %v453
    %v473 = vunpack.c.l.b16 %v454
    %v474 = vunpack.c.h.b16 %v454
    %v475 = vunpack.c.l.b16 %v455
    %v476 = vunpack.c.h.b16 %v455
    %v477 = vunpack.c.l.b16 %v456
    %v478 = vunpack.c.h.b16 %v456
    %v479 = vunpack.c.l.b16 %v457
    %v480 = vunpack.c.h.b16 %v457
    %v481 = vpack.c.b16 %v471, %v469
    %v482 = vpack.c.b16 %v472, %v470
    %v483 = vpack.c.b16 %v475, %v473
    %v484 = vpack.c.b16 %v476, %v474
    %v485 = vpack.c.b16 %v479, %v477
    %v486 = vpack.c.b16 %v480, %v478
    %v494 = vsel %vm227, %v462, 0
    %496 = vmatprep.subr.bf16.mxu0 0
    %497 = vmatpush1.bf16.msra.mxu0 0
    %498 = vmatprep.subr.bf16.mxu0 0
    %499 = vmatpush1.bf16.msra.mxu0 0
    %500 = vmatprep.subr.bf16.mxu0 0
    %501 = vmatpush1.bf16.msra.mxu0 0
    %502 = vmatprep.subr.bf16.mxu0 0
    %503 = vmatpush1.bf16.msra.mxu0 0
    %504 = vmatprep.subr.bf16.mxu0 0
    %505 = vmatpush1.bf16.msra.mxu0 0
    %506 = vmatprep.subr.bf16.mxu0 %v486
    %507 = vmatpush1.bf16.msra.mxu0 %v485
    %508 = vmatprep.subr.bf16.mxu0 %v484
    %509 = vmatpush1.bf16.msra.mxu0 %v483
    %510 = vmatprep.subr.bf16.mxu0 %v482
    %511 = vmatpush1.bf16.msra.mxu0 %v481
    %512 = vmatprep.subr.bf16.mxu0 0
    %513 = vmatpush2.bf16.msra.mxu0 0
    %514 = vmatprep.subr.bf16.mxu0 0
    %515 = vmatpush2.bf16.msra.mxu0 0
    %516 = vmatprep.subr.bf16.mxu0 0
    %517 = vmatpush2.bf16.msra.mxu0 0
    %518 = vmatprep.subr.bf16.mxu0 0
    %519 = vmatpush2.bf16.msra.mxu0 0
    %520 = vmatprep.subr.bf16.mxu0 0
    %521 = vmatpush2.bf16.msra.mxu0 0
    %522 = vmatprep.subr.bf16.mxu0 0
    %523 = vmatpush2.bf16.msra.mxu0 0
    %524 = vmatprep.subr.bf16.mxu0 0
    %525 = vmatpush2.bf16.msra.mxu0 0
    %526 = vmatprep.subr.bf16.mxu0 0
    %527 = vmatpush2.bf16.msra.mxu0 0
    %528 = vmatprep.mubr.bf16.mxu0 0
    %529 = vmatmul.mubr.bf16.gmra.mxu0 %v494
    %v530 = vpop.f32.mrf.mxu0
    %v531 = vadd.f32 0.0, %v530
    %v532 = vpop.f32.mrf.mxu0
    %v533 = vadd.f32 0.0, %v532
    %v534 = vpop.f32.mrf.mxu0
    %v535 = vadd.f32 0.0, %v534
    %v536 = vpop.f32.mrf.mxu0
    %v537 = vadd.f32 0.0, %v536
    %538 = vdwg.mxu0
    %539 = vst [vmem:[#allocation4] sm:$0xff] %v531
    %540 = vst [vmem:[#allocation4 + $0x8] sm:$0xff] %v533
    %541 = vst [vmem:[#allocation4 + $0x10] sm:$0xff] %v535
    %542 = vst [vmem:[#allocation4 + $0x18] sm:$0xff] %v537
    %v543 = vmul.f32 %v531, %v531
    %v544 = vmul.f32 %v533, %v533
    %v545 = vmul.f32 %v535, %v535
    %v546 = vmul.f32 %v537, %v537
    %547 = vst [vmem:[#allocation4 + $0x20] sm:$0xff] %v543
    %548 = vst [vmem:[#allocation4 + $0x28] sm:$0xff] %v544
    %549 = vst [vmem:[#allocation4 + $0x30] sm:$0xff] %v545
    %550 = vst [vmem:[#allocation4 + $0x38] sm:$0xff] %v546
    %v551 = vld [vmem:[#allocation4] sm:$0xff]
    %v552 = vld [vmem:[#allocation4 + $0x8] sm:$0xff]
    %v553 = vld [vmem:[#allocation4 + $0x10] sm:$0xff]
    %v554 = vld [vmem:[#allocation4 + $0x18] sm:$0xff]
    %v555 = vld [vmem:[#allocation4 + $0x20] sm:$0xff]
    %v556 = vld [vmem:[#allocation4 + $0x28] sm:$0xff]
    %v557 = vld [vmem:[#allocation4 + $0x30] sm:$0xff]
    %v558 = vld [vmem:[#allocation4 + $0x38] sm:$0xff]
    %v559 = vadd.f32 %v551, %v552
    %560 = vadd.xlane.f32.xlu0 %v559
    %v561 = vpop.xlane.xlu0 %560
    %v562 = vadd.f32 %v553, %v554
    %563 = vadd.xlane.f32.xlu0 %v562
    %v564 = vpop.xlane.xlu0 %563
    %v565 = vadd.f32 %v555, %v556
    %566 = vadd.xlane.f32.xlu0 %v565
    %v567 = vpop.xlane.xlu0 %566
    %v568 = vadd.f32 %v557, %v558
    %569 = vadd.xlane.f32.xlu0 %v568
    %v570 = vpop.xlane.xlu0 %569
    %v571 = vmul.f32 %v561, 0.00390625
    %v572 = vmul.f32 %v564, 0.00390625
    %v573 = vmul.f32 %v567, 0.00390625
    %v574 = vmul.f32 %v570, 0.00390625
    %v575 = vmul.f32 %v571, %v571
    %v576 = vmul.f32 %v572, %v572
    %v577 = vsub.f32 %v573, %v575
    %v578 = vsub.f32 %v574, %v576
    %v579 = vld [vmem:[%s5] sm:$0xff]
    %v580 = vld [vmem:[%s5 + $0x8] sm:$0xff]
    %v581 = vadd.f32 %v577, 1e-05
    %v582 = vadd.f32 %v578, 1e-05
    %v583 = vrsqrt.pop %v581
    %v584 = vrsqrt.pop %v582
    %v585 = vmul.f32 %v579, %v583
    %v586 = vmul.f32 %v580, %v584
    %v587 = vld [vmem:[%s6] sm:$0xff]
    %v588 = vld [vmem:[%s6 + $0x8] sm:$0xff]
    %v589 = vmul.f32 %v571, %v585
    %v590 = vmul.f32 %v572, %v586
    %v591 = vsub.f32 %v587, %v589
    %v592 = vsub.f32 %v588, %v590
    %594 = vset.pattern.permute.xlu0 0
    %595 = vperm.xlu0 %594, %v585
    %v596 = vpop.permute.xlu0 %595
    %599 = vset.pattern.permute.xlu0 0
    %600 = vperm.xlu0 %599, %v586
    %v601 = vpop.permute.xlu0 %600
    %v603 = vmul.f32 %v531, %v596
    %v604 = vmul.f32 %v533, %v596
    %v605 = vmul.f32 %v535, %v601
    %v606 = vmul.f32 %v537, %v601
    %608 = vset.pattern.permute.xlu0 0
    %609 = vperm.xlu0 %608, %v591
    %v610 = vpop.permute.xlu0 %609
    %613 = vset.pattern.permute.xlu0 0
    %614 = vperm.xlu0 %613, %v592
    %v615 = vpop.permute.xlu0 %614
    %v617 = vadd.f32 %v603, %v610
    %v618 = vadd.f32 %v604, %v610
    %v619 = vadd.f32 %v605, %v615
    %v620 = vadd.f32 %v606, %v615
    %v621 = vmax.f32 %v617, 0.0
    %v622 = vmax.f32 %v618, 0.0
    %v623 = vmax.f32 %v619, 0.0
    %v624 = vmax.f32 %v620, 0.0
    %625 = vadd.xlane.f32.xlu0 %v621
    %v626 = vpop.xlane.xlu0 %625
    %627 = vadd.xlane.f32.xlu0 %v623
    %v628 = vpop.xlane.xlu0 %627
    %v629 = vmul.f32 %v626, 0.0078125
    %v630 = vmul.f32 %v628, 0.0078125
    %631 = vadd.xlane.f32.xlu0 %v622
    %v632 = vpop.xlane.xlu0 %631
    %633 = vadd.xlane.f32.xlu0 %v624
    %v634 = vpop.xlane.xlu0 %633
    %v635 = vmul.f32 %v632, 0.0078125
    %v636 = vmul.f32 %v634, 0.0078125
    %v637 = vsel %vm98, %v629, %v635
    %v638 = vsel %vm98, %v630, %v636
    %v639 = vld [vmem:[%s7] sm:$0x1]
    %v640 = vpack.c.bf16 %v638, %v637
    %v641 = vld [vmem:[%s8] sm:$0x3]
    %643 = vset.pattern.permute.xlu0 0
    %644 = vperm.xlu0 %643, %v641
    %v645 = vpop.permute.xlu0 %644
    %vm647 = vcmask 130048
    %v649 = vsel %vm647, %v639, 0
    %651 = vmatprep.subr.bf16.mxu0 0
    %652 = vmatpush1.bf16.msra.mxu0 0
    %653 = vmatprep.subr.bf16.mxu0 0
    %654 = vmatpush1.bf16.msra.mxu0 0
    %655 = vmatprep.subr.bf16.mxu0 0
    %656 = vmatpush1.bf16.msra.mxu0 0
    %657 = vmatprep.subr.bf16.mxu0 0
    %658 = vmatpush1.bf16.msra.mxu0 0
    %659 = vmatprep.subr.bf16.mxu0 0
    %660 = vmatpush1.bf16.msra.mxu0 0
    %661 = vmatprep.subr.bf16.mxu0 0
    %662 = vmatpush1.bf16.msra.mxu0 0
    %663 = vmatprep.subr.bf16.mxu0 0
    %664 = vmatpush1.bf16.msra.mxu0 0
    %665 = vmatprep.subr.bf16.mxu0 0
    %666 = vmatpush1.bf16.msra.mxu0 %v640
    %667 = vmatprep.subr.bf16.mxu0 0
    %668 = vmatpush2.bf16.msra.mxu0 0
    %669 = vmatprep.subr.bf16.mxu0 0
    %670 = vmatpush2.bf16.msra.mxu0 0
    %671 = vmatprep.subr.bf16.mxu0 0
    %672 = vmatpush2.bf16.msra.mxu0 0
    %673 = vmatprep.subr.bf16.mxu0 0
    %674 = vmatpush2.bf16.msra.mxu0 0
    %675 = vmatprep.subr.bf16.mxu0 0
    %676 = vmatpush2.bf16.msra.mxu0 0
    %677 = vmatprep.subr.bf16.mxu0 0
    %678 = vmatpush2.bf16.msra.mxu0 0
    %679 = vmatprep.subr.bf16.mxu0 0
    %680 = vmatpush2.bf16.msra.mxu0 0
    %681 = vmatprep.subr.bf16.mxu0 0
    %682 = vmatpush2.bf16.msra.mxu0 0
    %683 = vmatprep.mubr.bf16.mxu0 0
    %684 = vmatmul.mubr.bf16.gmra.mxu0 %v649
    %v685 = vpop.f32.mrf.mxu0
    %v686 = vadd.f32 %v645, %v685
    %v687 = vpop.f32.mrf.mxu0
    %v688 = vpop.f32.mrf.mxu0
    %v689 = vpop.f32.mrf.mxu0
    %690 = vdwg.mxu0
    %v691 = vmax.f32 %v686, 0.0
    %v692 = vld [vmem:[%s9] sm:$0xf]
    %v693 = vld [vmem:[%s9 + $0x4] sm:$0xf]
    %v694 = vpack.c.bf16 %v691, %v691
    %v695 = vld [vmem:[%s10] sm:$0xff]
    %v696 = vld [vmem:[%s10 + $0x8] sm:$0xff]
    %698 = vset.pattern.permute.xlu0 0
    %699 = vperm.xlu0 %698, %v695
    %v700 = vpop.permute.xlu0 %699
    %703 = vset.pattern.permute.xlu0 0
    %704 = vperm.xlu0 %703, %v696
    %v705 = vpop.permute.xlu0 %704
    %v709 = vunpack.c.l.b16 %v692
    %v710 = vunpack.c.l.b16 %v693
    %v711 = vpack.c.b16 %v710, %v709
    %vm712 = vcmask 15360
    %v714 = vsel %vm712, %v711, 0
    %vm716 = vcmask 1040384
    %v718 = vsel %vm716, %v694, 0
    %720 = vmatprep.subr.bf16.mxu0 0
    %721 = vmatpush1.bf16.msra.mxu0 0
    %722 = vmatprep.subr.bf16.mxu0 0
    %723 = vmatpush1.bf16.msra.mxu0 0
    %724 = vmatprep.subr.bf16.mxu0 0
    %725 = vmatpush1.bf16.msra.mxu0 0
    %726 = vmatprep.subr.bf16.mxu0 0
    %727 = vmatpush1.bf16.msra.mxu0 0
    %728 = vmatprep.subr.bf16.mxu0 0
    %729 = vmatpush1.bf16.msra.mxu0 0
    %730 = vmatprep.subr.bf16.mxu0 0
    %731 = vmatpush1.bf16.msra.mxu0 0
    %732 = vmatprep.subr.bf16.mxu0 0
    %733 = vmatpush1.bf16.msra.mxu0 0
    %734 = vmatprep.subr.bf16.mxu0 0
    %735 = vmatpush1.bf16.msra.mxu0 %v718
    %736 = vmatprep.subr.bf16.mxu0 0
    %737 = vmatpush2.bf16.msra.mxu0 0
    %738 = vmatprep.subr.bf16.mxu0 0
    %739 = vmatpush2.bf16.msra.mxu0 0
    %740 = vmatprep.subr.bf16.mxu0 0
    %741 = vmatpush2.bf16.msra.mxu0 0
    %742 = vmatprep.subr.bf16.mxu0 0
    %743 = vmatpush2.bf16.msra.mxu0 0
    %744 = vmatprep.subr.bf16.mxu0 0
    %745 = vmatpush2.bf16.msra.mxu0 0
    %746 = vmatprep.subr.bf16.mxu0 0
    %747 = vmatpush2.bf16.msra.mxu0 0
    %748 = vmatprep.subr.bf16.mxu0 0
    %749 = vmatpush2.bf16.msra.mxu0 0
    %750 = vmatprep.subr.bf16.mxu0 0
    %751 = vmatpush2.bf16.msra.mxu0 0
    %752 = vmatprep.mubr.bf16.mxu0 0
    %753 = vmatmul.mubr.bf16.gmra.mxu0 %v714
    %v754 = vpop.f32.mrf.mxu0
    %v755 = vadd.f32 %v700, %v754
    %v756 = vpop.f32.mrf.mxu0
    %v757 = vpop.f32.mrf.mxu0
    %v758 = vadd.f32 %v705, %v757
    %v759 = vpop.f32.mrf.mxu0
    %760 = vdwg.mxu0
    %v761 = vxor.u32 %v755, 2147483648
    %v762 = vxor.u32 %v758, 2147483648
    %v763 = vmul.f32 %v761, 1.442695
    %v764 = vpow.pop %v763
    %v765 = vmul.f32 %v762, 1.442695
    %v766 = vpow.pop %v765
    %v767 = vadd.f32 %v764, 1.0
    %v768 = vadd.f32 %v766, 1.0
    %v769 = vrcp.pop %v767
    %v770 = vmul.f32 1.0, %v769
    %v771 = vrcp.pop %v768
    %v772 = vmul.f32 1.0, %v771
    %774 = vset.pattern.permute.xlu0 0
    %775 = vperm.xlu0 %774, %v770
    %v776 = vpop.permute.xlu0 %775
    %779 = vset.pattern.permute.xlu0 0
    %780 = vperm.xlu0 %779, %v772
    %v781 = vpop.permute.xlu0 %780
    %783 = vset.pattern.permute.xlu0 1
    %784 = vperm.xlu0 %783, %v770
    %v785 = vpop.permute.xlu0 %784
    %787 = vset.pattern.permute.xlu0 1
    %788 = vperm.xlu0 %787, %v772
    %v789 = vpop.permute.xlu0 %788
    %v791 = vadd.f32 %v80, %v621
    %v792 = vadd.f32 %v81, %v622
    %v793 = vadd.f32 %v82, %v623
    %v794 = vadd.f32 %v83, %v624
    %v795 = vadd.f32 %v791, %v776
    %v796 = vadd.f32 %v793, %v781
    %797 = vst [vmem:[#allocation5] sm:$0xff] %v795
    %798 = vst [vmem:[#allocation5 + $0x8] sm:$0xff] %v796
    %v799 = vadd.f32 %v792, %v785
    %v800 = vadd.f32 %v794, %v789
    %s801 = scalar_lea.vmem [#allocation5], 16
    %802 = vst [vmem:[%s801] sm:$0xff] %v799
    %803 = vst [vmem:[%s801 + $0x8] sm:$0xff] %v800
    // Predicated region
    $region46: #{tpu_custom_call.1} parent=1 // pred_check
      _
    $region47: #{tpu_custom_call.1} parent=1 // pred_check_branch
      %805 = sbr.rel (0) target = $region49
    $region48: #{tpu_custom_call.1} parent=1 // pred_region
      %s807 = ssub.s32 512, 512
      %808 = vsyncadd [#allocation6], %s807
      %s809 = sshll.u32 [#allocation5], 4
      %s810 = int_to_ptr.vmem [resolvable:$true] %s809
      %815 = dma.vmem_to_hbm [thread:$0]  %s810, 512, %s11, [#allocation6], 128, 128, 8
    $region49: #{tpu_custom_call.1} parent=1 // pred_fallthru
      _
    // Predicated region
    $region50: #{tpu_custom_call.1} parent=1 // pred_check
      _
    $region51: #{tpu_custom_call.1} parent=1 // pred_check_branch
      %817 = sbr.rel (0) target = $region53
    $region52: #{tpu_custom_call.1} parent=1 // pred_region
      %818 = dma.done [#allocation6], 512
    $region53: #{tpu_custom_call.1} parent=1 // pred_fallthru
      _
    %819 = vsyncpa [#allocation6], 1

</llo_original>
